<compile_context>
chip_gen: v5e
topology: v5e:2x2
jax: 0.10.0
libtpu: 0.0.40
codegen_flags: <defaults>
</compile_context>

<pallas_src>
import jax
import jax.numpy as jnp
from jax.experimental import pallas as pl
from jax.experimental.pallas import tpu as pltpu


def _cdiv(a, b):
    return (a + b - 1) // b


def _round_up(n, m):
    return _cdiv(n, m) * m


def critic_kernel(xa_ref, w1t_ref, w2t_ref, w3t_ref, bias_ref, out_ref):
    # Shapes (feature-major): xa (in1, TB) bf16, w1t (H, in1), w2t (H, H),
    # w3t (1, H) bf16, bias_ref (H, 3) f32 packed as [b1 | b2 | b3@row0].
    bias = bias_ref[...]                      # (H, 3) f32, resident
    b1 = bias[:, 0:1]                         # (H, 1)
    b2 = bias[:, 1:2]                         # (H, 1)
    b3 = bias[0:1, 2:3]                       # (1, 1)

    # Layer 1: (H, in1) @ (in1, TB) -> (H, TB); bf16 operands, f32 accumulate.
    h1 = jnp.dot(w1t_ref[...], xa_ref[...], preferred_element_type=jnp.float32)
    h1 = jnp.maximum(h1 + b1, 0.0)

    # Layer 2 + relu: (H, H) @ (H, TB) -> (H, TB).
    h2 = jnp.dot(w2t_ref[...], h1.astype(w2t_ref.dtype),
                 preferred_element_type=jnp.float32)
    h2 = jnp.maximum(h2 + b2, 0.0)

    # Output layer (no activation): (1, H) @ (H, TB) -> (1, TB), lane-dense.
    out = jnp.dot(w3t_ref[...], h2.astype(w3t_ref.dtype),
                  preferred_element_type=jnp.float32)
    out_ref[...] = (out + b3).astype(out_ref.dtype)


def critic_forward(x, a, params, *, block_b=2048, compute_dtype=jnp.bfloat16,
                   core_parallel=False):
    """x: (B, state_size) f32, a: (B, action_size) f32 -> (B, 1) f32."""
    w1, b1, w2, b2, w3, b3 = params
    B = x.shape[0]
    in1, H = w1.shape

    # clamp + concat + transpose + bf16 cast are cheap layout plumbing -> wrapper.
    # Feature-major: batch on the lane axis.
    xa_t = jnp.concatenate([jnp.clip(x, -1.1, 1.1), a],
                           axis=1).astype(compute_dtype).T          # (in1, B)

    # Tile selection: as few grid steps as possible, lane-aligned (x128),
    # minimal padding waste for awkward batch sizes.
    n_tiles = max(1, _cdiv(B, block_b))
    tb = _round_up(_cdiv(B, n_tiles), 128)
    bp = tb * n_tiles
    if bp != B:
        xa_t = jnp.pad(xa_t, ((0, 0), (0, bp - B)))

    # Weights pre-transposed to feature-major; bf16 for the MXU.
    w1t = w1.T.astype(compute_dtype)                                # (H, in1)
    w2t = w2.T.astype(compute_dtype)                                # (H, H)
    w3t = w3.T.astype(compute_dtype)                                # (1, H)

    # Pack all three biases into a single resident f32 buffer (H, 3):
    # column 0 = b1, column 1 = b2, column 2 row 0 = b3.
    bias_pack = jnp.zeros((H, 3), jnp.float32)
    bias_pack = bias_pack.at[:, 0].set(b1.reshape(-1).astype(jnp.float32))
    bias_pack = bias_pack.at[:, 1].set(b2.reshape(-1).astype(jnp.float32))
    bias_pack = bias_pack.at[0, 2].set(b3.reshape(()).astype(jnp.float32))

    const = lambda shape: pl.BlockSpec(shape, lambda i: (0, 0))  # resident params

    weight_bytes = (in1 * H + H * H + H) * 2 + H * 3 * 4
    cost = pl.CostEstimate(
        flops=2 * bp * (in1 * H + H * H + H),
        transcendentals=0,
        bytes_accessed=bp * in1 * 2 + bp * 4 + weight_bytes,  # weights counted once
    )

    # pltpu.CORE_PARALLEL shards batch tiles across v7x's 2 TensorCores; plain
    # PARALLEL is used by default (single-TC v5e/v6e, or single-tile grids).
    sem = pltpu.CORE_PARALLEL if core_parallel else pltpu.PARALLEL

    out_t = pl.pallas_call(
        critic_kernel,
        out_shape=jax.ShapeDtypeStruct((1, bp), jnp.float32),
        grid=(n_tiles,),
        in_specs=[
            pl.BlockSpec((in1, tb), lambda i: (0, i)),  # activations: lane-tiled batch
            const((H, in1)),                            # w1^T
            const((H, H)),                              # w2^T
            const((1, H)),                              # w3^T
            const((H, 3)),                              # packed biases
        ],
        out_specs=pl.BlockSpec((1, tb), lambda i: (0, i)),
        compiler_params=pltpu.CompilerParams(dimension_semantics=(sem,)),
        cost_estimate=cost,
    )(xa_t, w1t, w2t, w3t, bias_pack)

    return out_t[0, :B].reshape(B, 1)


def init_params(key, state_size, action_size, hidden_size):
    """Deterministic PyTorch-style (uniform +-1/sqrt(fan_in)) init, f32 master."""
    ks = jax.random.split(key, 6)
    in1 = state_size + action_size

    def u(k, shape, fan_in):
        bound = 1.0 / jnp.sqrt(jnp.float32(fan_in))
        return jax.random.uniform(k, shape, jnp.float32, -bound, bound)

    w1 = u(ks[0], (in1, hidden_size), in1)           # (in, out) == PyTorch W.T
    b1 = u(ks[1], (1, hidden_size), in1)
    w2 = u(ks[2], (hidden_size, hidden_size), hidden_size)
    b2 = u(ks[3], (1, hidden_size), hidden_size)
    w3 = u(ks[4], (hidden_size, 1), hidden_size)
    b3 = u(ks[5], (1, 1), hidden_size)
    return (w1, b1, w2, b2, w3, b3)


def reference_forward(x, a, params):
    """Pure-JAX f32 reference matching the PyTorch module."""
    w1, b1, w2, b2, w3, b3 = params
    xa = jnp.concatenate([jnp.clip(x, -1.1, 1.1), a], axis=1)
    h1 = jax.nn.relu(xa @ w1 + b1)
    h2 = jax.nn.relu(h1 @ w2 + b2)
    return h2 @ w3 + b3


if __name__ == "__main__":
    state_size, action_size, hidden_size = 12, 4, 32

    key = jax.random.PRNGKey(0)
    kx, ka, kp = jax.random.split(key, 3)
    params = init_params(kp, state_size, action_size, hidden_size)

    # Small-batch check (single 128-wide tile, heavy padding path).
    batch = 8
    x = jax.random.normal(kx, (batch, state_size), jnp.float32) * 2.0  # exercises clamp
    a = jax.random.normal(ka, (batch, action_size), jnp.float32)
    out = jax.block_until_ready(critic_forward(x, a, params))
    ref = reference_forward(x, a, params)
    assert out.shape == (batch, 1)
    assert jnp.allclose(out, ref, atol=5e-2, rtol=5e-2)  # bf16 matmuls vs f32 ref

    # Larger batch, default tiling: single grid step with a 640-wide tile.
    batch2 = 520
    kx2, ka2 = jax.random.split(jax.random.PRNGKey(1))
    x2 = jax.random.normal(kx2, (batch2, state_size), jnp.float32) * 2.0
    a2 = jax.random.normal(ka2, (batch2, action_size), jnp.float32)
    out2 = jax.block_until_ready(critic_forward(x2, a2, params))
    ref2 = reference_forward(x2, a2, params)
    assert out2.shape == (batch2, 1)
    assert jnp.allclose(out2, ref2, atol=5e-2, rtol=5e-2)

    # Same batch with a small block_b to exercise the multi-tile grid path.
    out3 = jax.block_until_ready(critic_forward(x2, a2, params, block_b=256))
    assert out3.shape == (batch2, 1)
    assert jnp.allclose(out3, ref2, atol=5e-2, rtol=5e-2)

    print("KERNEL_OK")
</pallas_src>

<mosaic_0001>
module attributes {stable_mosaic.version = 11 : i64} {
  func.func @critic_kernel(%arg0: i32, %arg1: memref<16x128xbf16, #tpu.memory_space<vmem>>, %arg2: memref<32x16xbf16, #tpu.memory_space<vmem>>, %arg3: memref<32x32xbf16, #tpu.memory_space<vmem>>, %arg4: memref<1x32xbf16, #tpu.memory_space<vmem>>, %arg5: memref<32x3xf32, #tpu.memory_space<vmem>>, %arg6: memref<1x128xf32, #tpu.memory_space<vmem>>) attributes {dimension_semantics = [#tpu.dimension_semantics<parallel>], iteration_bounds = array<i64: 1>, scalar_prefetch = 0 : i64, scratch_operands = 0 : i64, tpu.core_type = #tpu.core_type<tc>, window_params = [{transform_indices = @transform_0, window_bounds = array<i64: 16, 128>}, {pipeline_mode = #tpu.pipeline_mode<synchronous>, transform_indices = @transform_1, window_bounds = array<i64: 32, 16>}, {pipeline_mode = #tpu.pipeline_mode<synchronous>, transform_indices = @transform_2, window_bounds = array<i64: 32, 32>}, {pipeline_mode = #tpu.pipeline_mode<synchronous>, transform_indices = @transform_3, window_bounds = array<i64: 1, 32>}, {pipeline_mode = #tpu.pipeline_mode<synchronous>, transform_indices = @transform_4, window_bounds = array<i64: 32, 3>}, {transform_indices = @transform_5, window_bounds = array<i64: 1, 128>}]} {
    %c0 = arith.constant 0 : index
    %c0_0 = arith.constant 0 : index
    %0 = vector.load %arg5[%c0, %c0_0] : memref<32x3xf32, #tpu.memory_space<vmem>>, vector<32x3xf32>
    %1 = vector.extract_strided_slice %0 {offsets = [0, 0], sizes = [32, 1], strides = [1, 1]} : vector<32x3xf32> to vector<32x1xf32>
    %2 = vector.extract_strided_slice %0 {offsets = [0, 1], sizes = [32, 1], strides = [1, 1]} : vector<32x3xf32> to vector<32x1xf32>
    %3 = vector.extract_strided_slice %0 {offsets = [0, 2], sizes = [1, 1], strides = [1, 1]} : vector<32x3xf32> to vector<1x1xf32>
    %c0_1 = arith.constant 0 : index
    %c0_2 = arith.constant 0 : index
    %4 = vector.load %arg2[%c0_1, %c0_2] : memref<32x16xbf16, #tpu.memory_space<vmem>>, vector<32x16xbf16>
    %c0_3 = arith.constant 0 : index
    %c0_4 = arith.constant 0 : index
    %5 = vector.load %arg1[%c0_3, %c0_4] : memref<16x128xbf16, #tpu.memory_space<vmem>>, vector<16x128xbf16>
    %cst = arith.constant dense<0.000000e+00> : vector<32x128xf32>
    %6 = tpu.matmul %4, %5, %cst {dimension_numbers = #tpu.dot_dimension_numbers<[1], [0], [0], [1], [0, 0, 1, 1], [], []>} : vector<32x16xbf16>, vector<16x128xbf16>, vector<32x128xf32> -> vector<32x128xf32>
    %7 = vector.broadcast %1 : vector<32x1xf32> to vector<32x128xf32>
    %8 = arith.addf %6, %7 : vector<32x128xf32>
    %cst_5 = arith.constant 0.000000e+00 : f32
    %9 = vector.broadcast %cst_5 : f32 to vector<32x128xf32>
    %10 = arith.maximumf %8, %9 : vector<32x128xf32>
    %c0_6 = arith.constant 0 : index
    %c0_7 = arith.constant 0 : index
    %11 = vector.load %arg3[%c0_6, %c0_7] : memref<32x32xbf16, #tpu.memory_space<vmem>>, vector<32x32xbf16>
    %12 = arith.truncf %10 : vector<32x128xf32> to vector<32x128xbf16>
    %cst_8 = arith.constant dense<0.000000e+00> : vector<32x128xf32>
    %13 = tpu.matmul %11, %12, %cst_8 {dimension_numbers = #tpu.dot_dimension_numbers<[1], [0], [0], [1], [0, 0, 1, 1], [], []>} : vector<32x32xbf16>, vector<32x128xbf16>, vector<32x128xf32> -> vector<32x128xf32>
    %14 = vector.broadcast %2 : vector<32x1xf32> to vector<32x128xf32>
    %15 = arith.addf %13, %14 : vector<32x128xf32>
    %cst_9 = arith.constant 0.000000e+00 : f32
    %16 = vector.broadcast %cst_9 : f32 to vector<32x128xf32>
    %17 = arith.maximumf %15, %16 : vector<32x128xf32>
    %c0_10 = arith.constant 0 : index
    %c0_11 = arith.constant 0 : index
    %18 = vector.load %arg4[%c0_10, %c0_11] : memref<1x32xbf16, #tpu.memory_space<vmem>>, vector<1x32xbf16>
    %19 = arith.truncf %17 : vector<32x128xf32> to vector<32x128xbf16>
    %cst_12 = arith.constant dense<0.000000e+00> : vector<1x128xf32>
    %20 = tpu.matmul %18, %19, %cst_12 {dimension_numbers = #tpu.dot_dimension_numbers<[1], [0], [0], [1], [0, 0, 1, 1], [], []>} : vector<1x32xbf16>, vector<32x128xbf16>, vector<1x128xf32> -> vector<1x128xf32>
    %21 = vector.broadcast %3 : vector<1x1xf32> to vector<1x128xf32>
    %22 = arith.addf %20, %21 : vector<1x128xf32>
    %c0_13 = arith.constant 0 : index
    %c0_14 = arith.constant 0 : index
    %23 = vector.load %arg6[%c0_13, %c0_14] : memref<1x128xf32, #tpu.memory_space<vmem>>, vector<1x128xf32>
    tpu.vector_store %arg6[%c0_13, %c0_14], %22 {strides = array<i32>} : memref<1x128xf32, #tpu.memory_space<vmem>>, vector<1x128xf32>,
    return
  }
  func.func @transform_0(%arg0: i32) -> (i32, i32) {
    %c0_i32 = arith.constant 0 : i32
    %c0_i32_0 = arith.constant 0 : i32
    return %c0_i32, %arg0 : i32, i32
  }
  func.func @transform_1(%arg0: i32) -> (i32, i32) {
    %c0_i32 = arith.constant 0 : i32
    %c0_i32_0 = arith.constant 0 : i32
    %c0_i32_1 = arith.constant 0 : i32
    return %c0_i32, %c0_i32_0 : i32, i32
  }
  func.func @transform_2(%arg0: i32) -> (i32, i32) {
    %c0_i32 = arith.constant 0 : i32
    %c0_i32_0 = arith.constant 0 : i32
    %c0_i32_1 = arith.constant 0 : i32
    return %c0_i32, %c0_i32_0 : i32, i32
  }
  func.func @transform_3(%arg0: i32) -> (i32, i32) {
    %c0_i32 = arith.constant 0 : i32
    %c0_i32_0 = arith.constant 0 : i32
    %c0_i32_1 = arith.constant 0 : i32
    return %c0_i32, %c0_i32_0 : i32, i32
  }
  func.func @transform_4(%arg0: i32) -> (i32, i32) {
    %c0_i32 = arith.constant 0 : i32
    %c0_i32_0 = arith.constant 0 : i32
    %c0_i32_1 = arith.constant 0 : i32
    return %c0_i32, %c0_i32_0 : i32, i32
  }
  func.func @transform_5(%arg0: i32) -> (i32, i32) {
    %c0_i32 = arith.constant 0 : i32
    %c0_i32_0 = arith.constant 0 : i32
    return %c0_i32, %arg0 : i32, i32
  }
}

</mosaic_0001>

<llo_original>
// kernel: tpu_custom_call.1
$region0: #{tpu_custom_call.1}
  #allocation0 [shape = 'u32[]', space=smem, size = 0x4, offset = 0x4, fixed_abs, tag = 'smem constant byte address 0x4 - core index']
  #allocation1 [shape = 'u32[72,128]{1,0:T(1,128)}', space=vmem, size = 0x9000, scoped, tag = 'internal scratch']
  %s0 = inlined_call_operand.vmem [shape: bf16[16,128], index: 0, kind: input, shape index: {}]
  %s1 = inlined_call_operand.vmem [shape: bf16[32,16], index: 1, kind: input, shape index: {}]
  %s2 = inlined_call_operand.vmem [shape: bf16[32,32], index: 2, kind: input, shape index: {}]
  %s3 = inlined_call_operand.vmem [shape: bf16[1,32], index: 3, kind: input, shape index: {}]
  %s4 = inlined_call_operand.vmem [shape: f32[32,3], index: 4, kind: input, shape index: {}]
  %s5 = inlined_call_operand.hbm [shape: f32[1,128], index: 5, kind: output, shape index: {}]
  %s6 = sld [smem:[#allocation0]]
  $region30: #{tpu_custom_call.1} parent=0
    _
  %s8 = ssub.s32 1, %s6
  %s9 = scalar_select 0, %s8, %s6
  $region1: #{tpu_custom_call.1} parent=0
    #allocation2 [shape = 'u8[512]{0}', space=vmem, size = 0x400, scoped, tag = 'output window, operand 0, single buffered']
    #allocation3 [shape = 's32[1]{0}', space=sflag, size = 0x4, scoped, tag = 'scoped memory for tpu_custom_call.1']
    %10 = vsyncpa [#allocation3], 0
    // Predicated region
    $region2: #{tpu_custom_call.1} parent=1 // pred_check
      _
    $region3: #{tpu_custom_call.1} parent=1 // pred_check_branch
      %12 = sbr.rel (0) target = $region5
    $region4: #{tpu_custom_call.1} parent=1 // pred_region
      _
    $region5: #{tpu_custom_call.1} parent=1 // pred_fallthru
      _
    // Predicated region
    $region6: #{tpu_custom_call.1} parent=1 // pred_check
      _
    $region7: #{tpu_custom_call.1} parent=1 // pred_check_branch
      %14 = sbr.rel (0) target = $region9
    $region8: #{tpu_custom_call.1} parent=1 // pred_region
      _
    $region9: #{tpu_custom_call.1} parent=1 // pred_fallthru
      _
    // Predicated region
    $region10: #{tpu_custom_call.1} parent=1 // pred_check
      _
    $region11: #{tpu_custom_call.1} parent=1 // pred_check_branch
      %16 = sbr.rel (0) target = $region13
    $region12: #{tpu_custom_call.1} parent=1 // pred_region
      _
    $region13: #{tpu_custom_call.1} parent=1 // pred_fallthru
      _
    // Predicated region
    $region14: #{tpu_custom_call.1} parent=1 // pred_check
      _
    $region15: #{tpu_custom_call.1} parent=1 // pred_check_branch
      %18 = sbr.rel (0) target = $region17
    $region16: #{tpu_custom_call.1} parent=1 // pred_region
      _
    $region17: #{tpu_custom_call.1} parent=1 // pred_fallthru
      _
    // Predicated region
    $region18: #{tpu_custom_call.1} parent=1 // pred_check
      _
    $region19: #{tpu_custom_call.1} parent=1 // pred_check_branch
      %20 = sbr.rel (0) target = $region21
    $region20: #{tpu_custom_call.1} parent=1 // pred_region
      _
    $region21: #{tpu_custom_call.1} parent=1 // pred_fallthru
      _
    %v22 = vld [vmem:[%s4] sm:$0xff]
    %v23 = vld [vmem:[%s4 + $0x8] sm:$0xff]
    %v24 = vld [vmem:[%s4 + $0x10] sm:$0xff]
    %v25 = vld [vmem:[%s4 + $0x18] sm:$0xff]
    %v26 = vld [vmem:[%s1] sm:$0xf]
    %v27 = vld [vmem:[%s1 + $0x4] sm:$0xf]
    %v28 = vld [vmem:[%s1 + $0x8] sm:$0xf]
    %v29 = vld [vmem:[%s1 + $0xc] sm:$0xf]
    %v30 = vld [vmem:[%s0] sm:$0xf]
    %v31 = vld [vmem:[%s0 + $0x4] sm:$0xf]
    %33 = vset.pattern.permute.xlu0 0
    %34 = vperm.xlu0 %33, %v22
    %v35 = vpop.permute.xlu0 %34
    %38 = vset.pattern.permute.xlu0 0
    %39 = vperm.xlu0 %38, %v23
    %v40 = vpop.permute.xlu0 %39
    %43 = vset.pattern.permute.xlu0 0
    %44 = vperm.xlu0 %43, %v24
    %v45 = vpop.permute.xlu0 %44
    %48 = vset.pattern.permute.xlu0 0
    %49 = vperm.xlu0 %48, %v25
    %v50 = vpop.permute.xlu0 %49
    %v56 = vunpack.c.l.b16 %v26
    %v57 = vunpack.c.l.b16 %v27
    %v58 = vunpack.c.l.b16 %v28
    %v59 = vunpack.c.l.b16 %v29
    %v60 = vpack.c.b16 %v57, %v56
    %v61 = vpack.c.b16 %v59, %v58
    %v64 = vunpack.c.l.b16 %v30
    %v65 = vunpack.c.l.b16 %v31
    %v66 = vpack.c.b16 %v65, %v64
    %vm68 = vcmask 130048
    %v70 = vsel %vm68, %v60, 0
    %v73 = vsel %vm68, %v61, 0
    %75 = vmatpush.bf16.msra.mxu0 0
    %76 = vmatpush.bf16.msra.mxu0 0
    %77 = vmatpush.bf16.msra.mxu0 0
    %78 = vmatpush.bf16.msra.mxu0 0
    %79 = vmatpush.bf16.msra.mxu0 0
    %80 = vmatpush.bf16.msra.mxu0 0
    %81 = vmatpush.bf16.msra.mxu0 0
    %82 = vmatpush.bf16.msra.mxu0 %v66
    %83 = vmatmul.bf16.gmra.mxu0 %v70
    %v84 = vpop.f32.mrf.mxu0
    %v85 = vadd.f32 %v35, %v84
    %v86 = vpop.f32.mrf.mxu0
    %v87 = vadd.f32 %v40, %v86
    %88 = vmatmul.bf16.gmra.mxu0 %v73
    %v89 = vpop.f32.mrf.mxu0
    %v90 = vadd.f32 %v45, %v89
    %v91 = vpop.f32.mrf.mxu0
    %v92 = vadd.f32 %v50, %v91
    %93 = vdwg.mxu0
    %v94 = vmax.f32 %v85, 0.0
    %v95 = vmax.f32 %v87, 0.0
    %v96 = vmax.f32 %v90, 0.0
    %v97 = vmax.f32 %v92, 0.0
    %v98 = vld [vmem:[%s2] sm:$0xf]
    %v99 = vld [vmem:[%s2 + $0x4] sm:$0xf]
    %v100 = vld [vmem:[%s2 + $0x8] sm:$0xf]
    %v101 = vld [vmem:[%s2 + $0xc] sm:$0xf]
    %v102 = vpack.c.bf16 %v95, %v94
    %v103 = vpack.c.bf16 %v97, %v96
    %104 = vset.pattern.permute.xlu0 1
    %105 = vperm.xlu0 %104, %v22
    %v106 = vpop.permute.xlu0 %105
    %108 = vset.pattern.permute.xlu0 1
    %109 = vperm.xlu0 %108, %v23
    %v110 = vpop.permute.xlu0 %109
    %112 = vset.pattern.permute.xlu0 1
    %113 = vperm.xlu0 %112, %v24
    %v114 = vpop.permute.xlu0 %113
    %116 = vset.pattern.permute.xlu0 1
    %117 = vperm.xlu0 %116, %v25
    %v118 = vpop.permute.xlu0 %117
    %v124 = vunpack.c.l.b16 %v98
    %v125 = vunpack.c.l.b16 %v99
    %v126 = vunpack.c.l.b16 %v100
    %v127 = vunpack.c.l.b16 %v101
    %v128 = vpack.c.b16 %v125, %v124
    %v129 = vpack.c.b16 %v127, %v126
    %vm130 = vcmask 261120
    %v132 = vsel %vm130, %v128, 0
    %v135 = vsel %vm130, %v129, 0
    %137 = vmatpush.bf16.msra.mxu0 0
    %138 = vmatpush.bf16.msra.mxu0 0
    %139 = vmatpush.bf16.msra.mxu0 0
    %140 = vmatpush.bf16.msra.mxu0 0
    %141 = vmatpush.bf16.msra.mxu0 0
    %142 = vmatpush.bf16.msra.mxu0 0
    %143 = vmatpush.bf16.msra.mxu0 %v103
    %144 = vmatpush.bf16.msra.mxu0 %v102
    %145 = vmatmul.bf16.gmra.mxu0 %v132
    %v146 = vpop.f32.mrf.mxu0
    %v147 = vadd.f32 %v106, %v146
    %v148 = vpop.f32.mrf.mxu0
    %v149 = vadd.f32 %v110, %v148
    %150 = vmatmul.bf16.gmra.mxu0 %v135
    %v151 = vpop.f32.mrf.mxu0
    %v152 = vadd.f32 %v114, %v151
    %v153 = vpop.f32.mrf.mxu0
    %v154 = vadd.f32 %v118, %v153
    %155 = vdwg.mxu0
    %v156 = vmax.f32 %v147, 0.0
    %v157 = vmax.f32 %v149, 0.0
    %v158 = vmax.f32 %v152, 0.0
    %v159 = vmax.f32 %v154, 0.0
    %v160 = vld [vmem:[%s3] sm:$0x1]
    %v161 = vpack.c.bf16 %v157, %v156
    %v162 = vpack.c.bf16 %v159, %v158
    %163 = vset.pattern.permute.xlu0 2
    %164 = vperm.xlu0 %163, %v22
    %v165 = vpop.permute.xlu0 %164
    %v168 = vsel %vm130, %v160, 0
    %170 = vmatpush.bf16.msra.mxu0 0
    %171 = vmatpush.bf16.msra.mxu0 0
    %172 = vmatpush.bf16.msra.mxu0 0
    %173 = vmatpush.bf16.msra.mxu0 0
    %174 = vmatpush.bf16.msra.mxu0 0
    %175 = vmatpush.bf16.msra.mxu0 0
    %176 = vmatpush.bf16.msra.mxu0 %v162
    %177 = vmatpush.bf16.msra.mxu0 %v161
    %178 = vmatmul.bf16.gmra.mxu0 %v168
    %v179 = vpop.f32.mrf.mxu0
    %v180 = vadd.f32 %v165, %v179
    %v181 = vpop.f32.mrf.mxu0
    %182 = vdwg.mxu0
    %183 = vst [vmem:[#allocation2] sm:$0x1] %v180
    // Predicated region
    $region22: #{tpu_custom_call.1} parent=1 // pred_check
      _
    $region23: #{tpu_custom_call.1} parent=1 // pred_check_branch
      %185 = sbr.rel (0) target = $region25
    $region24: #{tpu_custom_call.1} parent=1 // pred_region
      %187 = vsyncadd [#allocation3], 0
      %s189 = sshll.u32 [#allocation2], 4
      %s190 = int_to_ptr.vmem [resolvable:$true] %s189
      %s191 = sshll.u32 %s5, 4
      %s192 = int_to_ptr.hbm [resolvable:$true] %s191
      %194 = dma.vmem_to_hbm [thread:$0]  %s190, 16, %s192, [#allocation3]
    $region25: #{tpu_custom_call.1} parent=1 // pred_fallthru
      _
    // Predicated region
    $region26: #{tpu_custom_call.1} parent=1 // pred_check
      _
    $region27: #{tpu_custom_call.1} parent=1 // pred_check_branch
      %196 = sbr.rel (0) target = $region29
    $region28: #{tpu_custom_call.1} parent=1 // pred_region
      %198 = dma.done [#allocation3], 16
    $region29: #{tpu_custom_call.1} parent=1 // pred_fallthru
      _
    %199 = vsyncpa [#allocation3], 1

</llo_original>
